<compile_context>
chip_gen: v6e
topology: v6e:2x2x1
jax: 0.10.0
libtpu: 0.0.40
codegen_flags: <defaults>
</compile_context>

<pallas_src>
import functools

import jax
import jax.numpy as jnp
from jax.experimental import pallas as pl
from jax.experimental.pallas import tpu as pltpu

_MIB = 1 << 20
_NEG_SLOPE = 0.1  # matches nn.LeakyReLU(negative_slope=0.1) in the PyTorch module


def _leaky_relu(h, slope=_NEG_SLOPE):
    return jnp.where(h > 0, h, slope * h)


# --------------------------------------------------------------------------
# kernels
# --------------------------------------------------------------------------
def _fused_kernel(x_ref, w1_ref, b1_ref, w2_ref, b2_ref, w3_ref, b3_ref, o_ref,
                  *, inv_hw):
    """Whole-op fused kernel (VMEM-resident).  x_ref/o_ref: (B, C, HW)."""
    x = x_ref[...].astype(jnp.float32)
    m = jnp.sum(x, axis=-1) * inv_hw                                   # (B, C)
    h = jnp.dot(m, w1_ref[...], preferred_element_type=jnp.float32) + b1_ref[...]
    h = _leaky_relu(h)
    h = jnp.dot(h, w2_ref[...], preferred_element_type=jnp.float32) + b2_ref[...]
    h = _leaky_relu(h)
    h = jnp.dot(h, w3_ref[...], preferred_element_type=jnp.float32) + b3_ref[...]
    o_ref[...] = (x + h[:, :, None]).astype(o_ref.dtype)


def _mean_kernel(x_ref, m_ref, acc_ref, *, inv_hw, lane_chunks):
    """Per-(batch,channel) spatial mean.

    x_ref: (tr, thw) input tile; m_ref: (tr, 1) f32 output (block index constant
    along the reduction axis => resident); acc_ref: (tr, acc_w) f32 scratch.
    When thw % 128 == 0 the per-step accumulation is pure VALU adds on full
    lane-wide vregs; the cross-lane XLU reduce + narrow store happen once, in
    the final step.
    """
    j = pl.program_id(1)

    @pl.when(j == 0)
    def _():
        acc_ref[...] = jnp.zeros_like(acc_ref)

    x = x_ref[...].astype(jnp.float32)
    if lane_chunks > 0:
        p = x[:, 0:128]
        for c in range(1, lane_chunks):
            p = p + x[:, c * 128:(c + 1) * 128]
        acc_ref[...] += p
    else:
        acc_ref[...] += jnp.sum(x, axis=-1, keepdims=True)

    @pl.when(j == pl.num_programs(1) - 1)
    def _():
        m_ref[...] = jnp.sum(acc_ref[...], axis=-1, keepdims=True) * inv_hw


def _add_kernel(x_ref, h_ref, o_ref):
    """y = x + h (h broadcast along lanes).  x_ref/o_ref: (tr, thw); h_ref: (tr, 1)."""
    o_ref[...] = (x_ref[...].astype(jnp.float32) + h_ref[...]).astype(o_ref.dtype)


# --------------------------------------------------------------------------
# wrapper helpers
# --------------------------------------------------------------------------
def _sublane_align(itemsize):
    """Dtype-aware sublane alignment: 8 for f32, 16 for bf16, 32 for int8/fp8."""
    return 8 * max(1, 4 // int(itemsize))


def _pick_tile(n, cap, align):
    """Largest divisor of n that is <= cap and a multiple of `align`
    (or the full extent n, which is always a legal block dim)."""
    cap = max(1, min(cap, n))
    for t in range(cap, 0, -1):
        if n % t == 0 and (t % align == 0 or t == n):
            return t
    return n


def _vmem_limit(need_bytes):
    """Requested working set + slack; capped at 48 MiB (headroom on v7x 64 MiB/TC)."""
    need = int(need_bytes) + 4 * _MIB
    return int(max(16 * _MIB, min(need, 48 * _MIB)))


def _mlp(m, params):
    """3-layer MLP on (B, C) means in plain jnp (PyTorch Linear: y = x @ W.T + b)."""
    h = m @ params["w1"].T + params["b1"]
    h = _leaky_relu(h)
    h = h @ params["w2"].T + params["b2"]
    h = _leaky_relu(h)
    h = h @ params["w3"].T + params["b3"]
    return h


# --------------------------------------------------------------------------
# forward
# --------------------------------------------------------------------------
def _global_residual(x, params):
    """x: (B, C, H, W). params: PyTorch-layout Linear weights/biases."""
    B, C, H, W = x.shape
    R, HW = B * C, H * W
    itemsize = jnp.dtype(x.dtype).itemsize
    inv_hw = 1.0 / HW
    slab_bytes = R * HW * itemsize

    # ---- FAST PATH: whole slab (+ f32 working copy + output) fits in VMEM ----
    if slab_bytes <= 8 * _MIB:
        x3 = x.reshape(B, C, HW)
        w1t = params["w1"].T.astype(jnp.float32)
        w2t = params["w2"].T.astype(jnp.float32)
        w3t = params["w3"].T.astype(jnp.float32)
        b1 = params["b1"][None, :].astype(jnp.float32)
        b2 = params["b2"][None, :].astype(jnp.float32)
        b3 = params["b3"][None, :].astype(jnp.float32)
        vmem = pl.BlockSpec(memory_space=pltpu.MemorySpace.VMEM)
        need = 2 * slab_bytes + R * HW * 4 + _MIB
        out3 = pl.pallas_call(
            functools.partial(_fused_kernel, inv_hw=inv_hw),
            out_shape=jax.ShapeDtypeStruct((B, C, HW), x.dtype),
            in_specs=[vmem] * 7,
            out_specs=vmem,
            input_output_aliases={0: 0},          # residual add in place in HBM
            compiler_params=pltpu.CompilerParams(vmem_limit_bytes=_vmem_limit(need)),
            cost_estimate=pl.CostEstimate(
                flops=2 * R * HW + 24 * B * C * C,
                transcendentals=0,
                bytes_accessed=2 * slab_bytes),
        )(x3, w1t, b1, w2t, b2, w3t, b3)
        return out3.reshape(B, C, H, W)

    # ---- TILED PATH: two bandwidth-bound pipelined passes over (R, HW) ----
    x2 = x.reshape(R, HW)                          # spatial on lanes, B*C on sublanes
    align = _sublane_align(itemsize)
    thw = _pick_tile(HW, 4096, 128)
    # cap each x block at ~4 MiB => pass 2 double-buffered in+out ~16 MiB;
    # and aim for >= 2 row blocks so both v7x TensorCores get work.
    tr_cap = min(512, max(align, (4 * _MIB) // max(1, thw * itemsize)))
    if R >= 2 * align:
        tr_cap = min(tr_cap, R // 2)
    tr = _pick_tile(R, tr_cap, align)
    grid = (R // tr, HW // thw)
    x_blk = tr * thw * itemsize
    lane_chunks = thw // 128 if thw % 128 == 0 else 0
    acc_w = 128 if lane_chunks > 0 else 1

    # pass 1: spatial means (HBM-bound, reduction axis last + "arbitrary")
    means = pl.pallas_call(
        functools.partial(_mean_kernel, inv_hw=inv_hw, lane_chunks=lane_chunks),
        out_shape=jax.ShapeDtypeStruct((R, 1), jnp.float32),
        grid=grid,
        in_specs=[pl.BlockSpec((tr, thw), lambda i, j: (i, j))],
        out_specs=pl.BlockSpec((tr, 1), lambda i, j: (i, 0)),
        scratch_shapes=[pltpu.VMEM((tr, acc_w), jnp.float32)],
        compiler_params=pltpu.CompilerParams(
            dimension_semantics=("parallel", "arbitrary"),
            vmem_limit_bytes=_vmem_limit(2 * x_blk + 2 * tr * 4 + tr * acc_w * 4)),
        cost_estimate=pl.CostEstimate(
            flops=R * HW, transcendentals=0,
            bytes_accessed=R * HW * itemsize + R * 4),
    )(x2)

    # tiny MLP on the (B, C) means: plain jnp — microscopic, no extra Pallas launch
    h = _mlp(means.reshape(B, C), params).astype(jnp.float32)

    # pass 2: broadcast-add, in place on x (both grid axes parallel)
    out2 = pl.pallas_call(
        _add_kernel,
        out_shape=jax.ShapeDtypeStruct((R, HW), x.dtype),
        grid=grid,
        in_specs=[pl.BlockSpec((tr, thw), lambda i, j: (i, j)),
                  pl.BlockSpec((tr, 1), lambda i, j: (i, 0))],
        out_specs=pl.BlockSpec((tr, thw), lambda i, j: (i, j)),
        input_output_aliases={0: 0},
        compiler_params=pltpu.CompilerParams(
            dimension_semantics=("parallel", "parallel"),
            vmem_limit_bytes=_vmem_limit(4 * x_blk + 2 * tr * 4)),
        cost_estimate=pl.CostEstimate(
            flops=R * HW, transcendentals=0,
            bytes_accessed=2 * R * HW * itemsize + R * 4),
    )(x2, h.reshape(R, 1))

    return out2.reshape(B, C, H, W)


# Donating x lets the aliased add truly reuse x's HBM buffer (no copy).
# NOTE: only an optimization if the caller no longer needs x; otherwise XLA
# inserts a copy (still correct).
global_residual = jax.jit(_global_residual, donate_argnums=0)


# --------------------------------------------------------------------------
# reference + params
# --------------------------------------------------------------------------
def global_residual_ref(x, params):
    """Pure-JAX reference mirroring the PyTorch forward (LeakyReLU slope 0.1)."""
    m = x.mean(axis=(2, 3))  # (B, C)
    h = m @ params["w1"].T + params["b1"]
    h = jnp.where(h > 0, h, _NEG_SLOPE * h)
    h = h @ params["w2"].T + params["b2"]
    h = jnp.where(h > 0, h, _NEG_SLOPE * h)
    h = h @ params["w3"].T + params["b3"]
    return x + h[:, :, None, None]


def init_params(key, chan):
    """Deterministic synthetic init (shapes match the nn.Linear layers)."""
    k1, k2, k3, k4, k5, k6 = jax.random.split(key, 6)
    c2 = 2 * chan
    scale = 0.1
    return {
        "w1": scale * jax.random.normal(k1, (c2, chan), jnp.float32),   # Linear(chan, 2*chan)
        "b1": scale * jax.random.normal(k2, (c2,), jnp.float32),
        "w2": scale * jax.random.normal(k3, (c2, c2), jnp.float32),     # Linear(2*chan, 2*chan)
        "b2": scale * jax.random.normal(k4, (c2,), jnp.float32),
        "w3": scale * jax.random.normal(k5, (chan, c2), jnp.float32),   # Linear(2*chan, chan)
        "b3": scale * jax.random.normal(k6, (chan,), jnp.float32),
    }


if __name__ == "__main__":
    key = jax.random.PRNGKey(0)
    kx, kp = jax.random.split(key)

    B, C, H, W = 2, 4, 16, 16
    x = jax.random.normal(kx, (B, C, H, W), jnp.float32)
    params = init_params(kp, C)

    # Compute the reference first: x is donated (invalidated) by the kernel call.
    ref = jax.block_until_ready(global_residual_ref(x, params))

    out = global_residual(x, params)
    out = jax.block_until_ready(out)

    assert out.shape == (B, C, H, W)
    assert jnp.allclose(out, ref, atol=1e-4, rtol=1e-4), "mismatch vs JAX reference"

    print("KERNEL_OK")
</pallas_src>

<mosaic_0001>
module attributes {stable_mosaic.version = 11 : i64} {
  func.func @_fused_kernel(%arg0: memref<2x4x256xf32, #tpu.memory_space<vmem>>, %arg1: memref<4x8xf32, #tpu.memory_space<vmem>>, %arg2: memref<1x8xf32, #tpu.memory_space<vmem>>, %arg3: memref<8x8xf32, #tpu.memory_space<vmem>>, %arg4: memref<1x8xf32, #tpu.memory_space<vmem>>, %arg5: memref<8x4xf32, #tpu.memory_space<vmem>>, %arg6: memref<1x4xf32, #tpu.memory_space<vmem>>, %arg7: memref<2x4x256xf32, #tpu.memory_space<vmem>>) attributes {dimension_semantics = [], scalar_prefetch = 0 : i64, scratch_operands = 0 : i64, tpu.core_type = #tpu.core_type<tc>} {
    %c0 = arith.constant 0 : index
    %c0_0 = arith.constant 0 : index
    %c0_1 = arith.constant 0 : index
    %0 = vector.load %arg0[%c0, %c0_0, %c0_1] : memref<2x4x256xf32, #tpu.memory_space<vmem>>, vector<2x4x256xf32>
    %cst = arith.constant dense<0.000000e+00> : vector<2x4xf32>
    %1 = vector.multi_reduction <add>, %0, %cst [2] : vector<2x4x256xf32> to vector<2x4xf32>
    %cst_2 = arith.constant 3.906250e-03 : f32
    %2 = vector.broadcast %cst_2 : f32 to vector<2x4xf32>
    %3 = arith.mulf %1, %2 : vector<2x4xf32>
    %c0_3 = arith.constant 0 : index
    %c0_4 = arith.constant 0 : index
    %4 = vector.load %arg1[%c0_3, %c0_4] : memref<4x8xf32, #tpu.memory_space<vmem>>, vector<4x8xf32>
    %cst_5 = arith.constant dense<0.000000e+00> : vector<2x8xf32>
    %5 = tpu.matmul %3, %4, %cst_5 {dimension_numbers = #tpu.dot_dimension_numbers<[1], [0], [0], [1], [0, 0, 1, 1], [], []>} : vector<2x4xf32>, vector<4x8xf32>, vector<2x8xf32> -> vector<2x8xf32>
    %c0_6 = arith.constant 0 : index
    %c0_7 = arith.constant 0 : index
    %6 = vector.load %arg2[%c0_6, %c0_7] : memref<1x8xf32, #tpu.memory_space<vmem>>, vector<1x8xf32>
    %7 = vector.broadcast %6 : vector<1x8xf32> to vector<2x8xf32>
    %8 = arith.addf %5, %7 : vector<2x8xf32>
    %cst_8 = arith.constant 0.000000e+00 : f32
    %9 = vector.broadcast %cst_8 : f32 to vector<2x8xf32>
    %10 = arith.cmpf ogt, %8, %9 : vector<2x8xf32>
    %cst_9 = arith.constant 1.000000e-01 : f32
    %11 = vector.broadcast %cst_9 : f32 to vector<2x8xf32>
    %12 = arith.mulf %11, %8 : vector<2x8xf32>
    %13 = arith.select %10, %8, %12 : vector<2x8xi1>, vector<2x8xf32>
    %c0_10 = arith.constant 0 : index
    %c0_11 = arith.constant 0 : index
    %14 = vector.load %arg3[%c0_10, %c0_11] : memref<8x8xf32, #tpu.memory_space<vmem>>, vector<8x8xf32>
    %cst_12 = arith.constant dense<0.000000e+00> : vector<2x8xf32>
    %15 = tpu.matmul %13, %14, %cst_12 {dimension_numbers = #tpu.dot_dimension_numbers<[1], [0], [0], [1], [0, 0, 1, 1], [], []>} : vector<2x8xf32>, vector<8x8xf32>, vector<2x8xf32> -> vector<2x8xf32>
    %c0_13 = arith.constant 0 : index
    %c0_14 = arith.constant 0 : index
    %16 = vector.load %arg4[%c0_13, %c0_14] : memref<1x8xf32, #tpu.memory_space<vmem>>, vector<1x8xf32>
    %17 = vector.broadcast %16 : vector<1x8xf32> to vector<2x8xf32>
    %18 = arith.addf %15, %17 : vector<2x8xf32>
    %cst_15 = arith.constant 0.000000e+00 : f32
    %19 = vector.broadcast %cst_15 : f32 to vector<2x8xf32>
    %20 = arith.cmpf ogt, %18, %19 : vector<2x8xf32>
    %cst_16 = arith.constant 1.000000e-01 : f32
    %21 = vector.broadcast %cst_16 : f32 to vector<2x8xf32>
    %22 = arith.mulf %21, %18 : vector<2x8xf32>
    %23 = arith.select %20, %18, %22 : vector<2x8xi1>, vector<2x8xf32>
    %c0_17 = arith.constant 0 : index
    %c0_18 = arith.constant 0 : index
    %24 = vector.load %arg5[%c0_17, %c0_18] : memref<8x4xf32, #tpu.memory_space<vmem>>, vector<8x4xf32>
    %cst_19 = arith.constant dense<0.000000e+00> : vector<2x4xf32>
    %25 = tpu.matmul %23, %24, %cst_19 {dimension_numbers = #tpu.dot_dimension_numbers<[1], [0], [0], [1], [0, 0, 1, 1], [], []>} : vector<2x8xf32>, vector<8x4xf32>, vector<2x4xf32> -> vector<2x4xf32>
    %c0_20 = arith.constant 0 : index
    %c0_21 = arith.constant 0 : index
    %26 = vector.load %arg6[%c0_20, %c0_21] : memref<1x4xf32, #tpu.memory_space<vmem>>, vector<1x4xf32>
    %27 = vector.broadcast %26 : vector<1x4xf32> to vector<2x4xf32>
    %28 = arith.addf %25, %27 : vector<2x4xf32>
    %29 = vector.shape_cast %28 : vector<2x4xf32> to vector<2x4x1xf32>
    %30 = vector.broadcast %29 : vector<2x4x1xf32> to vector<2x4x256xf32>
    %31 = arith.addf %0, %30 : vector<2x4x256xf32>
    %c0_22 = arith.constant 0 : index
    %c0_23 = arith.constant 0 : index
    %c0_24 = arith.constant 0 : index
    %32 = vector.load %arg7[%c0_22, %c0_23, %c0_24] : memref<2x4x256xf32, #tpu.memory_space<vmem>>, vector<2x4x256xf32>
    tpu.vector_store %arg7[%c0_22, %c0_23, %c0_24], %31 {strides = array<i32>} : memref<2x4x256xf32, #tpu.memory_space<vmem>>, vector<2x4x256xf32>,
    return
  }
}

</mosaic_0001>

<llo_original>
// kernel: _global_residual.1
$region0: #{_global_residual.1}
  #allocation0 [shape = 'u32[]', space=smem, size = 0x4, offset = 0x4, fixed_abs, tag = 'smem constant byte address 0x4 - core index']
  #allocation1 [shape = 'u32[144,128]{1,0:T(1,128)}', space=vmem, size = 0x12000, scoped, tag = 'internal scratch']
  %s0 = inlined_call_operand.vmem [shape: f32[2,4,256], index: 0, kind: input, shape index: {}, may-alias: {0,7}]
  %s1 = inlined_call_operand.vmem [shape: f32[4,8], index: 1, kind: input, shape index: {}]
  %s2 = inlined_call_operand.vmem [shape: f32[1,8], index: 2, kind: input, shape index: {}]
  %s3 = inlined_call_operand.vmem [shape: f32[8,8], index: 3, kind: input, shape index: {}]
  %s4 = inlined_call_operand.vmem [shape: f32[1,8], index: 4, kind: input, shape index: {}]
  %s5 = inlined_call_operand.vmem [shape: f32[8,4], index: 5, kind: input, shape index: {}]
  %s6 = inlined_call_operand.vmem [shape: f32[1,4], index: 6, kind: input, shape index: {}]
  %s7 = inlined_call_operand.vmem [shape: f32[2,4,256], index: 7, kind: output, shape index: {}, may-alias: {0,7}]
  %s8 = sld [smem:[#allocation0]]
  $region38: #{_global_residual.1} parent=0
    _
  %s10 = ssub.s32 1, %s8
  %s11 = scalar_select 0, %s10, %s8
  // Predicated region
  $region2: #{_global_residual.1} parent=0 // pred_check
    _
  $region3: #{_global_residual.1} parent=0 // pred_check_branch
    %13 = sbr.rel (0) target = $region5
  $region4: #{_global_residual.1} parent=0 // pred_region
    _
  $region5: #{_global_residual.1} parent=0 // pred_fallthru
    _
  // Predicated region
  $region6: #{_global_residual.1} parent=0 // pred_check
    _
  $region7: #{_global_residual.1} parent=0 // pred_check_branch
    %15 = sbr.rel (0) target = $region9
  $region8: #{_global_residual.1} parent=0 // pred_region
    _
  $region9: #{_global_residual.1} parent=0 // pred_fallthru
    _
  // Predicated region
  $region10: #{_global_residual.1} parent=0 // pred_check
    _
  $region11: #{_global_residual.1} parent=0 // pred_check_branch
    %17 = sbr.rel (0) target = $region13
  $region12: #{_global_residual.1} parent=0 // pred_region
    _
  $region13: #{_global_residual.1} parent=0 // pred_fallthru
    _
  // Predicated region
  $region14: #{_global_residual.1} parent=0 // pred_check
    _
  $region15: #{_global_residual.1} parent=0 // pred_check_branch
    %19 = sbr.rel (0) target = $region17
  $region16: #{_global_residual.1} parent=0 // pred_region
    _
  $region17: #{_global_residual.1} parent=0 // pred_fallthru
    _
  // Predicated region
  $region18: #{_global_residual.1} parent=0 // pred_check
    _
  $region19: #{_global_residual.1} parent=0 // pred_check_branch
    %21 = sbr.rel (0) target = $region21
  $region20: #{_global_residual.1} parent=0 // pred_region
    _
  $region21: #{_global_residual.1} parent=0 // pred_fallthru
    _
  // Predicated region
  $region22: #{_global_residual.1} parent=0 // pred_check
    _
  $region23: #{_global_residual.1} parent=0 // pred_check_branch
    %23 = sbr.rel (0) target = $region25
  $region24: #{_global_residual.1} parent=0 // pred_region
    _
  $region25: #{_global_residual.1} parent=0 // pred_fallthru
    _
  // Predicated region
  $region26: #{_global_residual.1} parent=0 // pred_check
    _
  $region27: #{_global_residual.1} parent=0 // pred_check_branch
    %25 = sbr.rel (0) target = $region29
  $region28: #{_global_residual.1} parent=0 // pred_region
    _
  $region29: #{_global_residual.1} parent=0 // pred_fallthru
    _
  %v26 = vld [vmem:[%s0] sm:$0xff]
  %v27 = vld [vmem:[%s0 + $0x8] sm:$0xff]
  %v30 = vcombine.high %v26, %v26
  %v31 = vcombine.high %v27, %v27
  %vm34 = vcmask 1043456
  %v35 = vsel %vm34, %v26, 0.0
  %v36 = vsel %vm34, %v30, 0.0
  %v37 = vadd.f32 %v35, %v36
  %38 = vadd.xlane.f32.xlu0 %v37
  %v39 = vpop.xlane.xlu0 %38
  %v40 = vsel %vm34, %v27, 0.0
  %v41 = vsel %vm34, %v31, 0.0
  %v42 = vadd.f32 %v40, %v41
  %43 = vadd.xlane.f32.xlu0 %v42
  %v44 = vpop.xlane.xlu0 %43
  %v45 = vmul.f32 %v39, 0.00390625
  %v46 = vmul.f32 %v44, 0.00390625
  %v47 = vld [vmem:[%s1] sm:$0xf]
  %v48 = vld [vmem:[%s2] sm:$0x1]
  %v50 = vlaneseq
  %v51 = vshrl.u32 %v50, 7
  %v52 = vsub.s32 0, %v51
  %v53 = vrot.slane %v48, %v52
  %v57 = vlaneseq
  %v58 = vand.u32 %v57, 127
  %v59 = vlaneseq
  %v60 = vshrl.u32 %v59, 7
  %v61 = vsub.s32 %v58, %v60
  %v62 = vrot.slane %v45, %v61
  %v63 = vlaneseq
  %v64 = vshrl.u32 %v63, 7
  %v65 = vsub.s32 %v58, %v64
  %v66 = vrot.slane %v46, %v65
  %vm67 = vcmask 1041409
  %v68 = vsel %vm67, %v66, %v62
  %vm69 = vcmask 31744
  %v70 = vsel %vm69, %v68, 0
  %v73 = vsel %vm34, %v47, 0
  %75 = vmatprep.subr.mxu0 0.0
  %76 = vmatpush1.msra.mxu0 0.0
  %77 = vmatprep.subr.mxu0 0.0
  %78 = vmatpush1.msra.mxu0 0.0
  %79 = vmatprep.subr.mxu0 0.0
  %80 = vmatpush1.msra.mxu0 0.0
  %81 = vmatprep.subr.mxu0 0.0
  %82 = vmatpush1.msra.mxu0 0.0
  %83 = vmatprep.subr.mxu0 0.0
  %84 = vmatpush1.msra.mxu0 0.0
  %85 = vmatprep.subr.mxu0 0.0
  %86 = vmatpush1.msra.mxu0 0.0
  %87 = vmatprep.subr.mxu0 0.0
  %88 = vmatpush1.msra.mxu0 0.0
  %89 = vmatprep.subr.mxu0 0.0
  %90 = vmatpush1.msra.mxu0 0.0
  %91 = vmatprep.subr.mxu0 0.0
  %92 = vmatpush1.msra.mxu0 0.0
  %93 = vmatprep.subr.mxu0 0.0
  %94 = vmatpush1.msra.mxu0 0.0
  %95 = vmatprep.subr.mxu0 0.0
  %96 = vmatpush1.msra.mxu0 0.0
  %97 = vmatprep.subr.mxu0 0.0
  %98 = vmatpush1.msra.mxu0 0.0
  %99 = vmatprep.subr.mxu0 0.0
  %100 = vmatpush1.msra.mxu0 0.0
  %101 = vmatprep.subr.mxu0 0.0
  %102 = vmatpush1.msra.mxu0 0.0
  %103 = vmatprep.subr.mxu0 0.0
  %104 = vmatpush1.msra.mxu0 0.0
  %105 = vmatprep.subr.mxu0 0.0
  %106 = vmatpush1.msra.mxu0 %v73
  %107 = vmatprep.subr.mxu0 0.0
  %108 = vmatpush2.msra.mxu0 0.0
  %109 = vmatprep.subr.mxu0 0.0
  %110 = vmatpush2.msra.mxu0 0.0
  %111 = vmatprep.subr.mxu0 0.0
  %112 = vmatpush2.msra.mxu0 0.0
  %113 = vmatprep.subr.mxu0 0.0
  %114 = vmatpush2.msra.mxu0 0.0
  %115 = vmatprep.subr.mxu0 0.0
  %116 = vmatpush2.msra.mxu0 0.0
  %117 = vmatprep.subr.mxu0 0.0
  %118 = vmatpush2.msra.mxu0 0.0
  %119 = vmatprep.subr.mxu0 0.0
  %120 = vmatpush2.msra.mxu0 0.0
  %121 = vmatprep.subr.mxu0 0.0
  %122 = vmatpush2.msra.mxu0 0.0
  %123 = vmatprep.subr.mxu0 0.0
  %124 = vmatpush2.msra.mxu0 0.0
  %125 = vmatprep.subr.mxu0 0.0
  %126 = vmatpush2.msra.mxu0 0.0
  %127 = vmatprep.subr.mxu0 0.0
  %128 = vmatpush2.msra.mxu0 0.0
  %129 = vmatprep.subr.mxu0 0.0
  %130 = vmatpush2.msra.mxu0 0.0
  %131 = vmatprep.subr.mxu0 0.0
  %132 = vmatpush2.msra.mxu0 0.0
  %133 = vmatprep.subr.mxu0 0.0
  %134 = vmatpush2.msra.mxu0 0.0
  %135 = vmatprep.subr.mxu0 0.0
  %136 = vmatpush2.msra.mxu0 0.0
  %137 = vmatprep.subr.mxu0 0.0
  %138 = vmatpush2.msra.mxu0 0.0
  %139 = vmatprep.mubr.f32.mxu0 0.0
  %140 = vmatmul.mubr.f32.gmra.mxu0 %v70
  %v141 = vpop.f32.mrf.mxu0
  %v142 = vadd.f32 %v53, %v141
  %v143 = vpop.f32.mrf.mxu0
  %144 = vdwg.mxu0
  %vm145 = vcmp.gt.f32.partialorder %v142, 0.0
  %v146 = vmul.f32 %v142, 0.1
  %v147 = vsel %vm145, %v142, %v146
  %v148 = vld [vmem:[%s3] sm:$0xff]
  %v149 = vld [vmem:[%s4] sm:$0x1]
  %v151 = vlaneseq
  %v152 = vshrl.u32 %v151, 7
  %v153 = vsub.s32 0, %v152
  %v154 = vrot.slane %v149, %v153
  %vm156 = vcmask 64512
  %v158 = vsel %vm156, %v147, 0
  %160 = vmatprep.subr.mxu0 0.0
  %161 = vmatpush1.msra.mxu0 0.0
  %162 = vmatprep.subr.mxu0 0.0
  %163 = vmatpush1.msra.mxu0 0.0
  %164 = vmatprep.subr.mxu0 0.0
  %165 = vmatpush1.msra.mxu0 0.0
  %166 = vmatprep.subr.mxu0 0.0
  %167 = vmatpush1.msra.mxu0 0.0
  %168 = vmatprep.subr.mxu0 0.0
  %169 = vmatpush1.msra.mxu0 0.0
  %170 = vmatprep.subr.mxu0 0.0
  %171 = vmatpush1.msra.mxu0 0.0
  %172 = vmatprep.subr.mxu0 0.0
  %173 = vmatpush1.msra.mxu0 0.0
  %174 = vmatprep.subr.mxu0 0.0
  %175 = vmatpush1.msra.mxu0 0.0
  %176 = vmatprep.subr.mxu0 0.0
  %177 = vmatpush1.msra.mxu0 0.0
  %178 = vmatprep.subr.mxu0 0.0
  %179 = vmatpush1.msra.mxu0 0.0
  %180 = vmatprep.subr.mxu0 0.0
  %181 = vmatpush1.msra.mxu0 0.0
  %182 = vmatprep.subr.mxu0 0.0
  %183 = vmatpush1.msra.mxu0 0.0
  %184 = vmatprep.subr.mxu0 0.0
  %185 = vmatpush1.msra.mxu0 0.0
  %186 = vmatprep.subr.mxu0 0.0
  %187 = vmatpush1.msra.mxu0 0.0
  %188 = vmatprep.subr.mxu0 0.0
  %189 = vmatpush1.msra.mxu0 0.0
  %190 = vmatprep.subr.mxu0 0.0
  %191 = vmatpush1.msra.mxu0 %v148
  %192 = vmatprep.subr.mxu0 0.0
  %193 = vmatpush2.msra.mxu0 0.0
  %194 = vmatprep.subr.mxu0 0.0
  %195 = vmatpush2.msra.mxu0 0.0
  %196 = vmatprep.subr.mxu0 0.0
  %197 = vmatpush2.msra.mxu0 0.0
  %198 = vmatprep.subr.mxu0 0.0
  %199 = vmatpush2.msra.mxu0 0.0
  %200 = vmatprep.subr.mxu0 0.0
  %201 = vmatpush2.msra.mxu0 0.0
  %202 = vmatprep.subr.mxu0 0.0
  %203 = vmatpush2.msra.mxu0 0.0
  %204 = vmatprep.subr.mxu0 0.0
  %205 = vmatpush2.msra.mxu0 0.0
  %206 = vmatprep.subr.mxu0 0.0
  %207 = vmatpush2.msra.mxu0 0.0
  %208 = vmatprep.subr.mxu0 0.0
  %209 = vmatpush2.msra.mxu0 0.0
  %210 = vmatprep.subr.mxu0 0.0
  %211 = vmatpush2.msra.mxu0 0.0
  %212 = vmatprep.subr.mxu0 0.0
  %213 = vmatpush2.msra.mxu0 0.0
  %214 = vmatprep.subr.mxu0 0.0
  %215 = vmatpush2.msra.mxu0 0.0
  %216 = vmatprep.subr.mxu0 0.0
  %217 = vmatpush2.msra.mxu0 0.0
  %218 = vmatprep.subr.mxu0 0.0
  %219 = vmatpush2.msra.mxu0 0.0
  %220 = vmatprep.subr.mxu0 0.0
  %221 = vmatpush2.msra.mxu0 0.0
  %222 = vmatprep.subr.mxu0 0.0
  %223 = vmatpush2.msra.mxu0 0.0
  %224 = vmatprep.mubr.f32.mxu0 0.0
  %225 = vmatmul.mubr.f32.gmra.mxu0 %v158
  %v226 = vpop.f32.mrf.mxu0
  %v227 = vadd.f32 %v154, %v226
  %v228 = vpop.f32.mrf.mxu0
  %229 = vdwg.mxu0
  %vm230 = vcmp.gt.f32.partialorder %v227, 0.0
  %v231 = vmul.f32 %v227, 0.1
  %v232 = vsel %vm230, %v227, %v231
  %v233 = vld [vmem:[%s5] sm:$0xff]
  %v234 = vld [vmem:[%s6] sm:$0x1]
  %v236 = vlaneseq
  %v237 = vshrl.u32 %v236, 7
  %v238 = vsub.s32 0, %v237
  %v239 = vrot.slane %v234, %v238
  %v242 = vsel %vm156, %v232, 0
  %244 = vmatprep.subr.mxu0 0.0
  %245 = vmatpush1.msra.mxu0 0.0
  %246 = vmatprep.subr.mxu0 0.0
  %247 = vmatpush1.msra.mxu0 0.0
  %248 = vmatprep.subr.mxu0 0.0
  %249 = vmatpush1.msra.mxu0 0.0
  %250 = vmatprep.subr.mxu0 0.0
  %251 = vmatpush1.msra.mxu0 0.0
  %252 = vmatprep.subr.mxu0 0.0
  %253 = vmatpush1.msra.mxu0 0.0
  %254 = vmatprep.subr.mxu0 0.0
  %255 = vmatpush1.msra.mxu0 0.0
  %256 = vmatprep.subr.mxu0 0.0
  %257 = vmatpush1.msra.mxu0 0.0
  %258 = vmatprep.subr.mxu0 0.0
  %259 = vmatpush1.msra.mxu0 0.0
  %260 = vmatprep.subr.mxu0 0.0
  %261 = vmatpush1.msra.mxu0 0.0
  %262 = vmatprep.subr.mxu0 0.0
  %263 = vmatpush1.msra.mxu0 0.0
  %264 = vmatprep.subr.mxu0 0.0
  %265 = vmatpush1.msra.mxu0 0.0
  %266 = vmatprep.subr.mxu0 0.0
  %267 = vmatpush1.msra.mxu0 0.0
  %268 = vmatprep.subr.mxu0 0.0
  %269 = vmatpush1.msra.mxu0 0.0
  %270 = vmatprep.subr.mxu0 0.0
  %271 = vmatpush1.msra.mxu0 0.0
  %272 = vmatprep.subr.mxu0 0.0
  %273 = vmatpush1.msra.mxu0 0.0
  %274 = vmatprep.subr.mxu0 0.0
  %275 = vmatpush1.msra.mxu0 %v233
  %276 = vmatprep.subr.mxu0 0.0
  %277 = vmatpush2.msra.mxu0 0.0
  %278 = vmatprep.subr.mxu0 0.0
  %279 = vmatpush2.msra.mxu0 0.0
  %280 = vmatprep.subr.mxu0 0.0
  %281 = vmatpush2.msra.mxu0 0.0
  %282 = vmatprep.subr.mxu0 0.0
  %283 = vmatpush2.msra.mxu0 0.0
  %284 = vmatprep.subr.mxu0 0.0
  %285 = vmatpush2.msra.mxu0 0.0
  %286 = vmatprep.subr.mxu0 0.0
  %287 = vmatpush2.msra.mxu0 0.0
  %288 = vmatprep.subr.mxu0 0.0
  %289 = vmatpush2.msra.mxu0 0.0
  %290 = vmatprep.subr.mxu0 0.0
  %291 = vmatpush2.msra.mxu0 0.0
  %292 = vmatprep.subr.mxu0 0.0
  %293 = vmatpush2.msra.mxu0 0.0
  %294 = vmatprep.subr.mxu0 0.0
  %295 = vmatpush2.msra.mxu0 0.0
  %296 = vmatprep.subr.mxu0 0.0
  %297 = vmatpush2.msra.mxu0 0.0
  %298 = vmatprep.subr.mxu0 0.0
  %299 = vmatpush2.msra.mxu0 0.0
  %300 = vmatprep.subr.mxu0 0.0
  %301 = vmatpush2.msra.mxu0 0.0
  %302 = vmatprep.subr.mxu0 0.0
  %303 = vmatpush2.msra.mxu0 0.0
  %304 = vmatprep.subr.mxu0 0.0
  %305 = vmatpush2.msra.mxu0 0.0
  %306 = vmatprep.subr.mxu0 0.0
  %307 = vmatpush2.msra.mxu0 0.0
  %308 = vmatprep.mubr.f32.mxu0 0.0
  %309 = vmatmul.mubr.f32.gmra.mxu0 %v242
  %v310 = vpop.f32.mrf.mxu0
  %v311 = vadd.f32 %v239, %v310
  %v312 = vpop.f32.mrf.mxu0
  %313 = vdwg.mxu0
  %v314 = vlaneseq
  %v315 = vshrl.u32 %v314, 7
  %v316 = vsub.s32 0, %v315
  %v317 = vrot.slane %v311, %v316
  %319 = vbcast.lane.b32.xlu0 %v317, 256
  %v320 = vpop.permute.xlu0 %319
  %v321 = vlaneseq
  %v322 = vshrl.u32 %v321, 7
  %v323 = vsub.s32 1, %v322
  %v324 = vrot.slane %v311, %v323
  %326 = vbcast.lane.b32.xlu0 %v324, 256
  %v327 = vpop.permute.xlu0 %326
  %v331 = vunpack.c.l.s4 839922192
  %v332 = vunpack.c.0.s8 %v331
  %v333 = vlaneseq
  %v334 = vshrl.u32 %v333, 7
  %v335 = vsub.s32 %v332, %v334
  %v336 = vrot.slane %v320, %v335
  %v338 = vunpack.c.l.s4 839922192
  %v339 = vunpack.c.0.s8 %v338
  %v340 = vlaneseq
  %v341 = vshrl.u32 %v340, 7
  %v342 = vsub.s32 %v339, %v341
  %v343 = vrot.slane %v327, %v342
  %v346 = vadd.f32 %v26, %v336
  %v347 = vadd.f32 %v27, %v343
  %348 = vst [vmem:[%s7] sm:$0xff] %v346
  %349 = vst [vmem:[%s7 + $0x8] sm:$0xff] %v347
  // Predicated region
  $region30: #{_global_residual.1} parent=0 // pred_check
    _
  $region31: #{_global_residual.1} parent=0 // pred_check_branch
    %351 = sbr.rel (0) target = $region33
  $region32: #{_global_residual.1} parent=0 // pred_region
    _
  $region33: #{_global_residual.1} parent=0 // pred_fallthru
    _
  // Predicated region
  $region34: #{_global_residual.1} parent=0 // pred_check
    _
  $region35: #{_global_residual.1} parent=0 // pred_check_branch
    %353 = sbr.rel (0) target = $region37
  $region36: #{_global_residual.1} parent=0 // pred_region
    _
  $region37: #{_global_residual.1} parent=0 // pred_fallthru
    _

</llo_original>
